<compile_context>
chip_gen: v7x
topology: tpu7x:2x2x1
jax: 0.10.0
libtpu: 0.0.40
codegen_flags: <defaults>
</compile_context>

<pallas_src>
import functools

import jax
import jax.numpy as jnp
from jax import lax
from jax.experimental import pallas as pl
from jax.experimental.pallas import tpu as pltpu


# ----------------------------------------------------------------------------
# Single-shot fused kernel: Linear1 -> BatchNorm1d(train) -> ReLU -> Linear2
# (everything fits in VMEM; no grid).
# ----------------------------------------------------------------------------
def _soda_mlp_fused_kernel(x_ref, w1_ref, g_ref, beta_ref, w2_ref, b2_ref,
                           o_ref, *, eps):
    # Linear1 (b1 omitted: exactly cancelled by the BN mean subtraction).
    h = jnp.dot(x_ref[...], w1_ref[...], preferred_element_type=jnp.float32)

    # BatchNorm1d, training mode: per-feature batch stats, biased variance.
    mean = jnp.mean(h, axis=0, keepdims=True)
    cent = h - mean
    var = jnp.mean(cent * cent, axis=0, keepdims=True)
    hn = cent * lax.rsqrt(var + eps) * g_ref[...] + beta_ref[...]

    # ReLU (never leaves VMEM).
    hn = jnp.maximum(hn, 0.0)

    # Linear2 + bias; single lane-dense store.
    y = jnp.dot(hn.astype(w2_ref.dtype), w2_ref[...],
                preferred_element_type=jnp.float32) + b2_ref[...]
    o_ref[...] = y.astype(o_ref.dtype)


# ----------------------------------------------------------------------------
# Tiled fallback kernel for dims too large for the single-shot path.
# grid = (n_n out-feature tiles [outer], n_h hidden tiles [inner/reduction]).
# ----------------------------------------------------------------------------
def _soda_mlp_tiled_kernel(x_ref, w1_ref, g_ref, beta_ref, w2_ref, b2_ref,
                           o_ref, hn_ref, *, eps, th):
    j = pl.program_id(0)              # out-feature tile
    k = pl.program_id(1)              # hidden tile (reduction)
    col = pl.multiple_of(k * th, th)  # start of this hidden tile in [0, hidden)

    # Compute Linear1 + BN + ReLU for this hidden tile exactly once (j == 0)
    # and cache it; later output tiles re-use the cached activation.
    @pl.when(j == 0)
    def _compute_hidden_tile():
        h = jnp.dot(x_ref[...], w1_ref[...], preferred_element_type=jnp.float32)
        mean = jnp.mean(h, axis=0, keepdims=True)
        cent = h - mean
        var = jnp.mean(cent * cent, axis=0, keepdims=True)
        g = g_ref[:, pl.ds(col, th)]
        b = beta_ref[:, pl.ds(col, th)]
        hn = jnp.maximum(cent * lax.rsqrt(var + eps) * g + b, 0.0)
        hn_ref[:, pl.ds(col, th)] = hn.astype(hn_ref.dtype)

    # Output block is resident across the reduction axis: init with the bias
    # at k == 0, accumulate partial products in place (no separate scratch).
    @pl.when(k == 0)
    def _init_out():
        o_ref[...] = jnp.broadcast_to(b2_ref[...], o_ref.shape)

    hn_tile = hn_ref[:, pl.ds(col, th)]
    o_ref[...] += jnp.dot(hn_tile, w2_ref[...],
                          preferred_element_type=jnp.float32)


# ----------------------------------------------------------------------------
# Helpers
# ----------------------------------------------------------------------------
def _pick_tile(dim, cap):
    """Largest multiple of 128 that divides `dim` and is <= cap, else full dim."""
    if dim % 128 != 0:
        return dim
    t = min(dim, cap)
    t -= t % 128
    while t >= 128:
        if dim % t == 0:
            return t
        t -= 128
    return dim


def _fits_single_shot(B, in_dim, hidden, out_dim, itemsize=4,
                      budget_bytes=20 * 1024 * 1024):
    work = (B * in_dim + in_dim * hidden + hidden * out_dim   # x, W1, W2
            + 2 * B * hidden                                  # h / hn intermediates
            + B * out_dim                                     # output
            + 3 * hidden + out_dim) * itemsize                # gamma, beta, (b1), b2
    return work <= budget_bytes


# ----------------------------------------------------------------------------
# Wrapper
# ----------------------------------------------------------------------------
def soda_mlp_forward(params, x, *, eps=1e-5, matmul_dtype=jnp.float32,
                     force_tiled=False, th_cap=512, tn_cap=512):
    w1, _b1 = params["fc1"]   # b1 unused: cancelled by training-mode BN mean
    gamma, beta = params["bn"]
    w2, b2 = params["fc2"]

    B, in_dim = x.shape
    hidden = w1.shape[1]
    out_dim = w2.shape[1]

    # Matmul inputs may be bf16 (v5e/v6e/v7x MXU native; halves weight DMA);
    # BN / bias / output math stays f32 with f32 accumulation.
    xm = x.astype(matmul_dtype)
    w1m = w1.astype(matmul_dtype)
    w2m = w2.astype(matmul_dtype)
    gamma2 = gamma.reshape(1, hidden).astype(jnp.float32)
    beta2 = beta.reshape(1, hidden).astype(jnp.float32)
    b2_2 = b2.reshape(1, out_dim).astype(jnp.float32)

    itemsize = jnp.dtype(matmul_dtype).itemsize
    cost = pl.CostEstimate(
        flops=2 * B * in_dim * hidden + 2 * B * hidden * out_dim,
        transcendentals=hidden,
        bytes_accessed=(B * in_dim + in_dim * hidden + hidden * out_dim) * itemsize
        + (2 * hidden + out_dim + B * out_dim) * 4,
    )

    # ---- Single-shot path: whole problem resident in VMEM, one grid step ----
    if not force_tiled and _fits_single_shot(B, in_dim, hidden, out_dim):
        kernel = functools.partial(_soda_mlp_fused_kernel, eps=eps)
        return pl.pallas_call(
            kernel,
            out_shape=jax.ShapeDtypeStruct((B, out_dim), jnp.float32),
            cost_estimate=cost,
        )(xm, w1m, gamma2, beta2, w2m, b2_2)

    # ---- Tiled fallback for large hidden/out dims ----
    th = _pick_tile(hidden, th_cap)    # hidden (reduction) tile
    tn = _pick_tile(out_dim, tn_cap)   # output-feature tile
    n_h = hidden // th
    n_n = out_dim // tn

    kernel = functools.partial(_soda_mlp_tiled_kernel, eps=eps, th=th)

    return pl.pallas_call(
        kernel,
        out_shape=jax.ShapeDtypeStruct((B, out_dim), jnp.float32),
        grid_spec=pltpu.PrefetchScalarGridSpec(
            num_scalar_prefetch=0,
            grid=(n_n, n_h),
            in_specs=[
                pl.BlockSpec((B, in_dim), lambda j, k: (0, 0)),     # x (resident)
                pl.BlockSpec((in_dim, th), lambda j, k: (0, k)),    # W1 tile
                pl.BlockSpec((1, hidden), lambda j, k: (0, 0)),     # gamma (resident)
                pl.BlockSpec((1, hidden), lambda j, k: (0, 0)),     # beta (resident)
                pl.BlockSpec((th, tn), lambda j, k: (k, j)),        # W2 tile
                pl.BlockSpec((1, tn), lambda j, k: (0, j)),         # b2 tile (per j only)
            ],
            out_specs=pl.BlockSpec((B, tn), lambda j, k: (0, j)),
            scratch_shapes=[pltpu.VMEM((B, hidden), w2m.dtype)],    # hn cache
        ),
        compiler_params=pltpu.CompilerParams(
            # hn cache requires sequential out-feature iteration; the hidden
            # axis is a reduction -> both "arbitrary".
            dimension_semantics=("arbitrary", "arbitrary"),
        ),
        cost_estimate=cost,
    )(xm, w1m, gamma2, beta2, w2m, b2_2)


# ----------------------------------------------------------------------------
# Parameter init mirroring weight_init(): orthogonal Linear weights, zero
# biases; BatchNorm1d gamma=1, beta=0.
# ----------------------------------------------------------------------------
def init_params(key, in_dim, hidden_dim, out_dim):
    k1, k2 = jax.random.split(key)
    ortho = jax.nn.initializers.orthogonal()
    # torch stores Linear weight as (out, in); we store (in, out) for x @ W.
    w1 = ortho(k1, (in_dim, hidden_dim), jnp.float32)
    w2 = ortho(k2, (hidden_dim, out_dim), jnp.float32)
    return {
        "fc1": (w1, jnp.zeros((hidden_dim,), jnp.float32)),
        "bn": (jnp.ones((hidden_dim,), jnp.float32),
               jnp.zeros((hidden_dim,), jnp.float32)),
        "fc2": (w2, jnp.zeros((out_dim,), jnp.float32)),
    }


# Pure-JAX reference (same math, b1 included) for the correctness gate.
def reference_forward(params, x, eps=1e-5):
    w1, b1 = params["fc1"]
    gamma, beta = params["bn"]
    w2, b2 = params["fc2"]
    h = x @ w1 + b1
    mean = jnp.mean(h, axis=0, keepdims=True)
    var = jnp.mean((h - mean) ** 2, axis=0, keepdims=True)
    hn = (h - mean) * lax.rsqrt(var + eps) * gamma + beta
    return jnp.maximum(hn, 0.0) @ w2 + b2


# ----------------------------------------------------------------------------
if __name__ == "__main__":
    key = jax.random.PRNGKey(0)
    k_param, k_x = jax.random.split(key)

    # SODA-sized demo: exercises the single-shot fused path.
    B, in_dim, hidden_dim, out_dim = 8, 50, 512, 50
    x = jax.random.normal(k_x, (B, in_dim), jnp.float32)
    params = init_params(k_param, in_dim, hidden_dim, out_dim)

    fwd = jax.jit(soda_mlp_forward)
    out = jax.block_until_ready(fwd(params, x))
    assert out.shape == (B, out_dim), out.shape
    assert out.dtype == jnp.float32
    ref = reference_forward(params, x)
    err = float(jnp.max(jnp.abs(out - ref)))
    assert err < 1e-3, err

    # Also validate the tiled fallback path (forced, small tile caps so the
    # grid is genuinely multi-tile: n_n=2, n_h=4).
    k_p2, k_x2 = jax.random.split(k_param)
    out_dim2 = 256
    params2 = init_params(k_p2, in_dim, hidden_dim, out_dim2)
    x2 = jax.random.normal(k_x2, (B, in_dim), jnp.float32)
    fwd_tiled = jax.jit(functools.partial(
        soda_mlp_forward, force_tiled=True, th_cap=128, tn_cap=128))
    out2 = jax.block_until_ready(fwd_tiled(params2, x2))
    ref2 = reference_forward(params2, x2)
    err2 = float(jnp.max(jnp.abs(out2 - ref2)))
    assert out2.shape == (B, out_dim2) and err2 < 1e-3, (out2.shape, err2)

    print("KERNEL_OK")
</pallas_src>

<mosaic_0001>
module attributes {stable_mosaic.version = 11 : i64} {
  func.func @_soda_mlp_fused_kernel(%arg0: memref<8x50xf32, #tpu.memory_space<vmem>>, %arg1: memref<50x512xf32, #tpu.memory_space<vmem>>, %arg2: memref<1x512xf32, #tpu.memory_space<vmem>>, %arg3: memref<1x512xf32, #tpu.memory_space<vmem>>, %arg4: memref<512x50xf32, #tpu.memory_space<vmem>>, %arg5: memref<1x50xf32, #tpu.memory_space<vmem>>, %arg6: memref<8x50xf32, #tpu.memory_space<vmem>>) attributes {dimension_semantics = [], scalar_prefetch = 0 : i64, scratch_operands = 0 : i64, tpu.core_type = #tpu.core_type<tc>} {
    %c0 = arith.constant 0 : index
    %c0_0 = arith.constant 0 : index
    %0 = vector.load %arg0[%c0, %c0_0] : memref<8x50xf32, #tpu.memory_space<vmem>>, vector<8x50xf32>
    %c0_1 = arith.constant 0 : index
    %c0_2 = arith.constant 0 : index
    %1 = vector.load %arg1[%c0_1, %c0_2] : memref<50x512xf32, #tpu.memory_space<vmem>>, vector<50x512xf32>
    %cst = arith.constant dense<0.000000e+00> : vector<8x512xf32>
    %2 = tpu.matmul %0, %1, %cst {dimension_numbers = #tpu.dot_dimension_numbers<[1], [0], [0], [1], [0, 0, 1, 1], [], []>} : vector<8x50xf32>, vector<50x512xf32>, vector<8x512xf32> -> vector<8x512xf32>
    %cst_3 = arith.constant dense<0.000000e+00> : vector<512xf32>
    %3 = vector.multi_reduction <add>, %2, %cst_3 [0] : vector<8x512xf32> to vector<512xf32>
    %4 = vector.shape_cast %3 : vector<512xf32> to vector<1x512xf32>
    %cst_4 = arith.constant 8.000000e+00 : f32
    %5 = vector.broadcast %cst_4 : f32 to vector<1x512xf32>
    %6 = arith.divf %4, %5 : vector<1x512xf32>
    %7 = vector.broadcast %6 : vector<1x512xf32> to vector<8x512xf32>
    %8 = arith.subf %2, %7 : vector<8x512xf32>
    %9 = arith.mulf %8, %8 : vector<8x512xf32>
    %cst_5 = arith.constant dense<0.000000e+00> : vector<512xf32>
    %10 = vector.multi_reduction <add>, %9, %cst_5 [0] : vector<8x512xf32> to vector<512xf32>
    %11 = vector.shape_cast %10 : vector<512xf32> to vector<1x512xf32>
    %cst_6 = arith.constant 8.000000e+00 : f32
    %12 = vector.broadcast %cst_6 : f32 to vector<1x512xf32>
    %13 = arith.divf %11, %12 : vector<1x512xf32>
    %cst_7 = arith.constant 9.99999974E-6 : f32
    %14 = vector.broadcast %cst_7 : f32 to vector<1x512xf32>
    %15 = arith.addf %13, %14 : vector<1x512xf32>
    %16 = math.rsqrt %15 : vector<1x512xf32>
    %17 = vector.broadcast %16 : vector<1x512xf32> to vector<8x512xf32>
    %18 = arith.mulf %8, %17 : vector<8x512xf32>
    %c0_8 = arith.constant 0 : index
    %c0_9 = arith.constant 0 : index
    %19 = vector.load %arg2[%c0_8, %c0_9] : memref<1x512xf32, #tpu.memory_space<vmem>>, vector<1x512xf32>
    %20 = vector.broadcast %19 : vector<1x512xf32> to vector<8x512xf32>
    %21 = arith.mulf %18, %20 : vector<8x512xf32>
    %c0_10 = arith.constant 0 : index
    %c0_11 = arith.constant 0 : index
    %22 = vector.load %arg3[%c0_10, %c0_11] : memref<1x512xf32, #tpu.memory_space<vmem>>, vector<1x512xf32>
    %23 = vector.broadcast %22 : vector<1x512xf32> to vector<8x512xf32>
    %24 = arith.addf %21, %23 : vector<8x512xf32>
    %cst_12 = arith.constant 0.000000e+00 : f32
    %25 = vector.broadcast %cst_12 : f32 to vector<8x512xf32>
    %26 = arith.maximumf %24, %25 : vector<8x512xf32>
    %c0_13 = arith.constant 0 : index
    %c0_14 = arith.constant 0 : index
    %27 = vector.load %arg4[%c0_13, %c0_14] : memref<512x50xf32, #tpu.memory_space<vmem>>, vector<512x50xf32>
    %cst_15 = arith.constant dense<0.000000e+00> : vector<8x50xf32>
    %28 = tpu.matmul %26, %27, %cst_15 {dimension_numbers = #tpu.dot_dimension_numbers<[1], [0], [0], [1], [0, 0, 1, 1], [], []>} : vector<8x512xf32>, vector<512x50xf32>, vector<8x50xf32> -> vector<8x50xf32>
    %c0_16 = arith.constant 0 : index
    %c0_17 = arith.constant 0 : index
    %29 = vector.load %arg5[%c0_16, %c0_17] : memref<1x50xf32, #tpu.memory_space<vmem>>, vector<1x50xf32>
    %30 = vector.broadcast %29 : vector<1x50xf32> to vector<8x50xf32>
    %31 = arith.addf %28, %30 : vector<8x50xf32>
    %c0_18 = arith.constant 0 : index
    %c0_19 = arith.constant 0 : index
    %32 = vector.load %arg6[%c0_18, %c0_19] : memref<8x50xf32, #tpu.memory_space<vmem>>, vector<8x50xf32>
    tpu.vector_store %arg6[%c0_18, %c0_19], %31 {strides = array<i32>} : memref<8x50xf32, #tpu.memory_space<vmem>>, vector<8x50xf32>,
    return
  }
}

</mosaic_0001>

<llo_original>
// kernel: soda_mlp_forward.1
$region0: #{soda_mlp_forward.1}
  #allocation0 [shape = 'u32[]', space=smem, size = 0x4, offset = 0x4, fixed_abs, tag = 'smem constant byte address 0x4 - core index']
  #allocation1 [shape = 'u32[144,128]{1,0:T(1,128)}', space=vmem, size = 0x12000, scoped, tag = 'internal scratch']
  %s0 = inlined_call_operand.vmem [shape: f32[8,50], index: 0, kind: input, shape index: {}]
  %s1 = inlined_call_operand.vmem [shape: f32[50,512], index: 1, kind: input, shape index: {}]
  %s2 = inlined_call_operand.vmem [shape: f32[1,512], index: 2, kind: input, shape index: {}]
  %s3 = inlined_call_operand.vmem [shape: f32[1,512], index: 3, kind: input, shape index: {}]
  %s4 = inlined_call_operand.vmem [shape: f32[512,50], index: 4, kind: input, shape index: {}]
  %s5 = inlined_call_operand.vmem [shape: f32[1,50], index: 5, kind: input, shape index: {}]
  %s6 = inlined_call_operand.hbm [shape: f32[8,50], index: 6, kind: output, shape index: {}]
  %s7 = sld [smem:[#allocation0]]
  $region34: #{soda_mlp_forward.1} parent=0
    _
  %s9 = ssub.s32 1, %s7
  %s10 = scalar_select 0, %s9, %s7
  $region1: #{soda_mlp_forward.1} parent=0
    #allocation2 [shape = 'u8[4096]{0}', space=vmem, size = 0x1000, scoped, tag = 'output window, operand 0, single buffered']
    #allocation3 [shape = 's32[1]{0}', space=sflag, size = 0x4, scoped, tag = 'scoped memory for soda_mlp_forward.1']
    %11 = vsyncpa [#allocation3], 0
    // Predicated region
    $region2: #{soda_mlp_forward.1} parent=1 // pred_check
      _
    $region3: #{soda_mlp_forward.1} parent=1 // pred_check_branch
      %13 = sbr.rel (0) target = $region5
    $region4: #{soda_mlp_forward.1} parent=1 // pred_region
      _
    $region5: #{soda_mlp_forward.1} parent=1 // pred_fallthru
      _
    // Predicated region
    $region6: #{soda_mlp_forward.1} parent=1 // pred_check
      _
    $region7: #{soda_mlp_forward.1} parent=1 // pred_check_branch
      %15 = sbr.rel (0) target = $region9
    $region8: #{soda_mlp_forward.1} parent=1 // pred_region
      _
    $region9: #{soda_mlp_forward.1} parent=1 // pred_fallthru
      _
    // Predicated region
    $region10: #{soda_mlp_forward.1} parent=1 // pred_check
      _
    $region11: #{soda_mlp_forward.1} parent=1 // pred_check_branch
      %17 = sbr.rel (0) target = $region13
    $region12: #{soda_mlp_forward.1} parent=1 // pred_region
      _
    $region13: #{soda_mlp_forward.1} parent=1 // pred_fallthru
      _
    // Predicated region
    $region14: #{soda_mlp_forward.1} parent=1 // pred_check
      _
    $region15: #{soda_mlp_forward.1} parent=1 // pred_check_branch
      %19 = sbr.rel (0) target = $region17
    $region16: #{soda_mlp_forward.1} parent=1 // pred_region
      _
    $region17: #{soda_mlp_forward.1} parent=1 // pred_fallthru
      _
    // Predicated region
    $region18: #{soda_mlp_forward.1} parent=1 // pred_check
      _
    $region19: #{soda_mlp_forward.1} parent=1 // pred_check_branch
      %21 = sbr.rel (0) target = $region21
    $region20: #{soda_mlp_forward.1} parent=1 // pred_region
      _
    $region21: #{soda_mlp_forward.1} parent=1 // pred_fallthru
      _
    // Predicated region
    $region22: #{soda_mlp_forward.1} parent=1 // pred_check
      _
    $region23: #{soda_mlp_forward.1} parent=1 // pred_check_branch
      %23 = sbr.rel (0) target = $region25
    $region24: #{soda_mlp_forward.1} parent=1 // pred_region
      _
    $region25: #{soda_mlp_forward.1} parent=1 // pred_fallthru
      _
    %v24 = vld [vmem:[%s0] sm:$0xff]
    %v25 = vld [vmem:[%s1] sm:$0xff]
    %v26 = vld [vmem:[%s1 + $0x8] sm:$0xff]
    %v27 = vld [vmem:[%s1 + $0x10] sm:$0xff]
    %v28 = vld [vmem:[%s1 + $0x18] sm:$0xff]
    %v29 = vld [vmem:[%s1 + $0x20] sm:$0xff]
    %v30 = vld [vmem:[%s1 + $0x28] sm:$0xff]
    %v31 = vld [vmem:[%s1 + $0x30] sm:$0xff]
    %v32 = vld [vmem:[%s1 + $0x38] sm:$0xff]
    %v33 = vld [vmem:[%s1 + $0x40] sm:$0xff]
    %v34 = vld [vmem:[%s1 + $0x48] sm:$0xff]
    %v35 = vld [vmem:[%s1 + $0x50] sm:$0xff]
    %v36 = vld [vmem:[%s1 + $0x58] sm:$0xff]
    %v37 = vld [vmem:[%s1 + $0x60] sm:$0xff]
    %v38 = vld [vmem:[%s1 + $0x68] sm:$0xff]
    %v39 = vld [vmem:[%s1 + $0x70] sm:$0xff]
    %v40 = vld [vmem:[%s1 + $0x78] sm:$0xff]
    %v41 = vld [vmem:[%s1 + $0x80] sm:$0xff]
    %v42 = vld [vmem:[%s1 + $0x88] sm:$0xff]
    %v43 = vld [vmem:[%s1 + $0x90] sm:$0xff]
    %v44 = vld [vmem:[%s1 + $0x98] sm:$0xff]
    %v45 = vld [vmem:[%s1 + $0xa0] sm:$0xff]
    %v46 = vld [vmem:[%s1 + $0xa8] sm:$0xff]
    %v47 = vld [vmem:[%s1 + $0xb0] sm:$0xff]
    %v48 = vld [vmem:[%s1 + $0xb8] sm:$0xff]
    %v49 = vld [vmem:[%s1 + $0xc0] sm:$0x3]
    %v50 = vld [vmem:[%s1 + $0xc8] sm:$0x3]
    %v51 = vld [vmem:[%s1 + $0xd0] sm:$0x3]
    %v52 = vld [vmem:[%s1 + $0xd8] sm:$0x3]
    %vm53 = vcmask 408576
    %v55 = vsel %vm53, %v24, 0
    %vm57 = vcmask 1041408
    %v59 = vsel %vm57, %v49, 0
    %v62 = vsel %vm57, %v50, 0
    %v65 = vsel %vm57, %v51, 0
    %v68 = vsel %vm57, %v52, 0
    %70 = vmatprep.subr.mxu0 %v26
    %71 = vmatpush1.msra.mxu0 %v25
    %72 = vmatprep.subr.mxu0 %v30
    %73 = vmatpush1.msra.mxu0 %v29
    %74 = vmatprep.subr.mxu0 %v34
    %75 = vmatpush1.msra.mxu0 %v33
    %76 = vmatprep.subr.mxu0 %v38
    %77 = vmatpush1.msra.mxu0 %v37
    %78 = vmatprep.subr.mxu0 %v42
    %79 = vmatpush1.msra.mxu0 %v41
    %80 = vmatprep.subr.mxu0 %v46
    %81 = vmatpush1.msra.mxu0 %v45
    %82 = vmatprep.subr.mxu0 %v62
    %83 = vmatpush1.msra.mxu0 %v59
    %84 = vmatprep.subr.mxu0 0.0
    %85 = vmatpush1.msra.mxu0 0.0
    %86 = vmatprep.subr.mxu0 0.0
    %87 = vmatpush1.msra.mxu0 0.0
    %88 = vmatprep.subr.mxu0 0.0
    %89 = vmatpush1.msra.mxu0 0.0
    %90 = vmatprep.subr.mxu0 0.0
    %91 = vmatpush1.msra.mxu0 0.0
    %92 = vmatprep.subr.mxu0 0.0
    %93 = vmatpush1.msra.mxu0 0.0
    %94 = vmatprep.subr.mxu0 0.0
    %95 = vmatpush1.msra.mxu0 0.0
    %96 = vmatprep.subr.mxu0 0.0
    %97 = vmatpush1.msra.mxu0 0.0
    %98 = vmatprep.subr.mxu0 0.0
    %99 = vmatpush1.msra.mxu0 0.0
    %100 = vmatprep.subr.mxu0 0.0
    %101 = vmatpush1.msra.mxu0 0.0
    %102 = vmatprep.subr.mxu0 0.0
    %103 = vmatpush1.msra.mxu0 0.0
    %104 = vmatprep.subr.mxu0 0.0
    %105 = vmatpush1.msra.mxu0 0.0
    %106 = vmatprep.subr.mxu0 0.0
    %107 = vmatpush1.msra.mxu0 0.0
    %108 = vmatprep.subr.mxu0 0.0
    %109 = vmatpush1.msra.mxu0 0.0
    %110 = vmatprep.subr.mxu0 0.0
    %111 = vmatpush1.msra.mxu0 0.0
    %112 = vmatprep.subr.mxu0 0.0
    %113 = vmatpush1.msra.mxu0 0.0
    %114 = vmatprep.subr.mxu0 0.0
    %115 = vmatpush1.msra.mxu0 0.0
    %116 = vmatprep.subr.mxu0 0.0
    %117 = vmatpush1.msra.mxu0 0.0
    %118 = vmatprep.subr.mxu0 0.0
    %119 = vmatpush1.msra.mxu0 0.0
    %120 = vmatprep.subr.mxu0 0.0
    %121 = vmatpush1.msra.mxu0 0.0
    %122 = vmatprep.subr.mxu0 0.0
    %123 = vmatpush1.msra.mxu0 0.0
    %124 = vmatprep.subr.mxu0 0.0
    %125 = vmatpush1.msra.mxu0 0.0
    %126 = vmatprep.subr.mxu0 0.0
    %127 = vmatpush1.msra.mxu0 0.0
    %128 = vmatprep.subr.mxu0 0.0
    %129 = vmatpush1.msra.mxu0 0.0
    %130 = vmatprep.subr.mxu0 0.0
    %131 = vmatpush1.msra.mxu0 0.0
    %132 = vmatprep.subr.mxu0 0.0
    %133 = vmatpush1.msra.mxu0 0.0
    %134 = vmatprep.mubr.f32.mxu0 0.0
    %135 = vmatmul.mubr.f32.gmra.mrb[0].mxu0 %v55
    %v136 = vpop.f32.mrb[0].mxu0
    %v137 = vadd.f32 0.0, %v136
    %v138 = vpop.f32.mrb[0].mxu0
    %v139 = vadd.f32 0.0, %v138
    %140 = vdwg.mxu0
    %141 = vmatprep.subr.mxu0 %v28
    %142 = vmatpush1.msra.mxu0 %v27
    %143 = vmatprep.subr.mxu0 %v32
    %144 = vmatpush1.msra.mxu0 %v31
    %145 = vmatprep.subr.mxu0 %v36
    %146 = vmatpush1.msra.mxu0 %v35
    %147 = vmatprep.subr.mxu0 %v40
    %148 = vmatpush1.msra.mxu0 %v39
    %149 = vmatprep.subr.mxu0 %v44
    %150 = vmatpush1.msra.mxu0 %v43
    %151 = vmatprep.subr.mxu0 %v48
    %152 = vmatpush1.msra.mxu0 %v47
    %153 = vmatprep.subr.mxu0 %v68
    %154 = vmatpush1.msra.mxu0 %v65
    %155 = vmatprep.subr.mxu0 0.0
    %156 = vmatpush1.msra.mxu0 0.0
    %157 = vmatprep.subr.mxu0 0.0
    %158 = vmatpush1.msra.mxu0 0.0
    %159 = vmatprep.subr.mxu0 0.0
    %160 = vmatpush1.msra.mxu0 0.0
    %161 = vmatprep.subr.mxu0 0.0
    %162 = vmatpush1.msra.mxu0 0.0
    %163 = vmatprep.subr.mxu0 0.0
    %164 = vmatpush1.msra.mxu0 0.0
    %165 = vmatprep.subr.mxu0 0.0
    %166 = vmatpush1.msra.mxu0 0.0
    %167 = vmatprep.subr.mxu0 0.0
    %168 = vmatpush1.msra.mxu0 0.0
    %169 = vmatprep.subr.mxu0 0.0
    %170 = vmatpush1.msra.mxu0 0.0
    %171 = vmatprep.subr.mxu0 0.0
    %172 = vmatpush1.msra.mxu0 0.0
    %173 = vmatprep.subr.mxu0 0.0
    %174 = vmatpush1.msra.mxu0 0.0
    %175 = vmatprep.subr.mxu0 0.0
    %176 = vmatpush1.msra.mxu0 0.0
    %177 = vmatprep.subr.mxu0 0.0
    %178 = vmatpush1.msra.mxu0 0.0
    %179 = vmatprep.subr.mxu0 0.0
    %180 = vmatpush1.msra.mxu0 0.0
    %181 = vmatprep.subr.mxu0 0.0
    %182 = vmatpush1.msra.mxu0 0.0
    %183 = vmatprep.subr.mxu0 0.0
    %184 = vmatpush1.msra.mxu0 0.0
    %185 = vmatprep.subr.mxu0 0.0
    %186 = vmatpush1.msra.mxu0 0.0
    %187 = vmatprep.subr.mxu0 0.0
    %188 = vmatpush1.msra.mxu0 0.0
    %189 = vmatprep.subr.mxu0 0.0
    %190 = vmatpush1.msra.mxu0 0.0
    %191 = vmatprep.subr.mxu0 0.0
    %192 = vmatpush1.msra.mxu0 0.0
    %193 = vmatprep.subr.mxu0 0.0
    %194 = vmatpush1.msra.mxu0 0.0
    %195 = vmatprep.subr.mxu0 0.0
    %196 = vmatpush1.msra.mxu0 0.0
    %197 = vmatprep.subr.mxu0 0.0
    %198 = vmatpush1.msra.mxu0 0.0
    %199 = vmatprep.subr.mxu0 0.0
    %200 = vmatpush1.msra.mxu0 0.0
    %201 = vmatprep.subr.mxu0 0.0
    %202 = vmatpush1.msra.mxu0 0.0
    %203 = vmatprep.subr.mxu0 0.0
    %204 = vmatpush1.msra.mxu0 0.0
    %205 = vmatprep.mubr.f32.mxu0 0.0
    %206 = vmatmul.mubr.f32.gmra.mrb[0].mxu0 %v55
    %v207 = vpop.f32.mrb[0].mxu0
    %v208 = vadd.f32 0.0, %v207
    %v209 = vpop.f32.mrb[0].mxu0
    %v210 = vadd.f32 0.0, %v209
    %211 = vdwg.mxu0
    %v212 = vrot.slane %v137, 4
    %v213 = vadd.f32 %v137, %v212
    %v214 = vrot.slane %v213, 2
    %v215 = vadd.f32 %v213, %v214
    %v216 = vrot.slane %v215, 1
    %v217 = vadd.f32 %v215, %v216
    %v218 = vrot.slane %v139, 4
    %v219 = vadd.f32 %v139, %v218
    %v220 = vrot.slane %v219, 2
    %v221 = vadd.f32 %v219, %v220
    %v222 = vrot.slane %v221, 1
    %v223 = vadd.f32 %v221, %v222
    %v224 = vrot.slane %v208, 4
    %v225 = vadd.f32 %v208, %v224
    %v226 = vrot.slane %v225, 2
    %v227 = vadd.f32 %v225, %v226
    %v228 = vrot.slane %v227, 1
    %v229 = vadd.f32 %v227, %v228
    %v230 = vrot.slane %v210, 4
    %v231 = vadd.f32 %v210, %v230
    %v232 = vrot.slane %v231, 2
    %v233 = vadd.f32 %v231, %v232
    %v234 = vrot.slane %v233, 1
    %v235 = vadd.f32 %v233, %v234
    %v236 = vrcp.pop 8.0
    %v237 = vmul.f32 %v217, %v236
    %v238 = vmul.f32 %v223, %v236
    %v239 = vmul.f32 %v229, %v236
    %v240 = vmul.f32 %v235, %v236
    %v241 = vsub.f32 %v137, %v237
    %v242 = vsub.f32 %v139, %v238
    %v243 = vsub.f32 %v208, %v239
    %v244 = vsub.f32 %v210, %v240
    %v245 = vmul.f32 %v241, %v241
    %v246 = vmul.f32 %v242, %v242
    %v247 = vmul.f32 %v243, %v243
    %v248 = vmul.f32 %v244, %v244
    %v249 = vrot.slane %v245, 4
    %v250 = vadd.f32 %v245, %v249
    %v251 = vrot.slane %v250, 2
    %v252 = vadd.f32 %v250, %v251
    %v253 = vrot.slane %v252, 1
    %v254 = vadd.f32 %v252, %v253
    %v255 = vrot.slane %v246, 4
    %v256 = vadd.f32 %v246, %v255
    %v257 = vrot.slane %v256, 2
    %v258 = vadd.f32 %v256, %v257
    %v259 = vrot.slane %v258, 1
    %v260 = vadd.f32 %v258, %v259
    %v261 = vrot.slane %v247, 4
    %v262 = vadd.f32 %v247, %v261
    %v263 = vrot.slane %v262, 2
    %v264 = vadd.f32 %v262, %v263
    %v265 = vrot.slane %v264, 1
    %v266 = vadd.f32 %v264, %v265
    %v267 = vrot.slane %v248, 4
    %v268 = vadd.f32 %v248, %v267
    %v269 = vrot.slane %v268, 2
    %v270 = vadd.f32 %v268, %v269
    %v271 = vrot.slane %v270, 1
    %v272 = vadd.f32 %v270, %v271
    %v273 = vmul.f32 %v254, %v236
    %v274 = vmul.f32 %v260, %v236
    %v275 = vmul.f32 %v266, %v236
    %v276 = vmul.f32 %v272, %v236
    %v277 = vadd.f32 %v273, 1e-05
    %v278 = vadd.f32 %v274, 1e-05
    %v279 = vadd.f32 %v275, 1e-05
    %v280 = vadd.f32 %v276, 1e-05
    %v281 = vrsqrt.pop %v277
    %v282 = vrsqrt.pop %v278
    %v283 = vrsqrt.pop %v279
    %v284 = vrsqrt.pop %v280
    %v285 = vmul.f32 %v241, %v281
    %v286 = vmul.f32 %v242, %v282
    %v287 = vmul.f32 %v243, %v283
    %v288 = vmul.f32 %v244, %v284
    %v289 = vld [vmem:[%s2] sm:$0xf]
    %v291 = vlaneseq
    %v292 = vshrl.u32 %v291, 7
    %v293 = vsub.s32 0, %v292
    %v294 = vrot.slane %v289, %v293
    %v295 = vlaneseq
    %v296 = vshrl.u32 %v295, 7
    %v297 = vsub.s32 1, %v296
    %v298 = vrot.slane %v289, %v297
    %v299 = vlaneseq
    %v300 = vshrl.u32 %v299, 7
    %v301 = vsub.s32 2, %v300
    %v302 = vrot.slane %v289, %v301
    %v303 = vlaneseq
    %v304 = vshrl.u32 %v303, 7
    %v305 = vsub.s32 3, %v304
    %v306 = vrot.slane %v289, %v305
    %v311 = vmul.f32 %v285, %v294
    %v312 = vmul.f32 %v286, %v298
    %v313 = vmul.f32 %v287, %v302
    %v314 = vmul.f32 %v288, %v306
    %v315 = vld [vmem:[%s3] sm:$0xf]
    %v317 = vlaneseq
    %v318 = vshrl.u32 %v317, 7
    %v319 = vsub.s32 0, %v318
    %v320 = vrot.slane %v315, %v319
    %v321 = vlaneseq
    %v322 = vshrl.u32 %v321, 7
    %v323 = vsub.s32 1, %v322
    %v324 = vrot.slane %v315, %v323
    %v325 = vlaneseq
    %v326 = vshrl.u32 %v325, 7
    %v327 = vsub.s32 2, %v326
    %v328 = vrot.slane %v315, %v327
    %v329 = vlaneseq
    %v330 = vshrl.u32 %v329, 7
    %v331 = vsub.s32 3, %v330
    %v332 = vrot.slane %v315, %v331
    %v337 = vadd.f32 %v311, %v320
    %v338 = vadd.f32 %v312, %v324
    %v339 = vadd.f32 %v313, %v328
    %v340 = vadd.f32 %v314, %v332
    %v341 = vmax.f32 %v337, 0.0
    %v342 = vmax.f32 %v338, 0.0
    %v343 = vmax.f32 %v339, 0.0
    %v344 = vmax.f32 %v340, 0.0
    %v345 = vld [vmem:[%s4] sm:$0xff]
    %v346 = vld [vmem:[%s4 + $0x8] sm:$0xff]
    %v347 = vld [vmem:[%s4 + $0x10] sm:$0xff]
    %v348 = vld [vmem:[%s4 + $0x18] sm:$0xff]
    %v349 = vld [vmem:[%s4 + $0x20] sm:$0xff]
    %v350 = vld [vmem:[%s4 + $0x28] sm:$0xff]
    %v351 = vld [vmem:[%s4 + $0x30] sm:$0xff]
    %v352 = vld [vmem:[%s4 + $0x38] sm:$0xff]
    %v353 = vld [vmem:[%s4 + $0x40] sm:$0xff]
    %v354 = vld [vmem:[%s4 + $0x48] sm:$0xff]
    %v355 = vld [vmem:[%s4 + $0x50] sm:$0xff]
    %v356 = vld [vmem:[%s4 + $0x58] sm:$0xff]
    %v357 = vld [vmem:[%s4 + $0x60] sm:$0xff]
    %v358 = vld [vmem:[%s4 + $0x68] sm:$0xff]
    %v359 = vld [vmem:[%s4 + $0x70] sm:$0xff]
    %v360 = vld [vmem:[%s4 + $0x78] sm:$0xff]
    %v361 = vld [vmem:[%s4 + $0x80] sm:$0xff]
    %v362 = vld [vmem:[%s4 + $0x88] sm:$0xff]
    %v363 = vld [vmem:[%s4 + $0x90] sm:$0xff]
    %v364 = vld [vmem:[%s4 + $0x98] sm:$0xff]
    %v365 = vld [vmem:[%s4 + $0xa0] sm:$0xff]
    %v366 = vld [vmem:[%s4 + $0xa8] sm:$0xff]
    %v367 = vld [vmem:[%s4 + $0xb0] sm:$0xff]
    %v368 = vld [vmem:[%s4 + $0xb8] sm:$0xff]
    %v369 = vld [vmem:[%s4 + $0xc0] sm:$0xff]
    %v370 = vld [vmem:[%s4 + $0xc8] sm:$0xff]
    %v371 = vld [vmem:[%s4 + $0xd0] sm:$0xff]
    %v372 = vld [vmem:[%s4 + $0xd8] sm:$0xff]
    %v373 = vld [vmem:[%s4 + $0xe0] sm:$0xff]
    %v374 = vld [vmem:[%s4 + $0xe8] sm:$0xff]
    %v375 = vld [vmem:[%s4 + $0xf0] sm:$0xff]
    %v376 = vld [vmem:[%s4 + $0xf8] sm:$0xff]
    %v377 = vld [vmem:[%s4 + $0x100] sm:$0xff]
    %v378 = vld [vmem:[%s4 + $0x108] sm:$0xff]
    %v379 = vld [vmem:[%s4 + $0x110] sm:$0xff]
    %v380 = vld [vmem:[%s4 + $0x118] sm:$0xff]
    %v381 = vld [vmem:[%s4 + $0x120] sm:$0xff]
    %v382 = vld [vmem:[%s4 + $0x128] sm:$0xff]
    %v383 = vld [vmem:[%s4 + $0x130] sm:$0xff]
    %v384 = vld [vmem:[%s4 + $0x138] sm:$0xff]
    %v385 = vld [vmem:[%s4 + $0x140] sm:$0xff]
    %v386 = vld [vmem:[%s4 + $0x148] sm:$0xff]
    %v387 = vld [vmem:[%s4 + $0x150] sm:$0xff]
    %v388 = vld [vmem:[%s4 + $0x158] sm:$0xff]
    %v389 = vld [vmem:[%s4 + $0x160] sm:$0xff]
    %v390 = vld [vmem:[%s4 + $0x168] sm:$0xff]
    %v391 = vld [vmem:[%s4 + $0x170] sm:$0xff]
    %v392 = vld [vmem:[%s4 + $0x178] sm:$0xff]
    %v393 = vld [vmem:[%s4 + $0x180] sm:$0xff]
    %v394 = vld [vmem:[%s4 + $0x188] sm:$0xff]
    %v395 = vld [vmem:[%s4 + $0x190] sm:$0xff]
    %v396 = vld [vmem:[%s4 + $0x198] sm:$0xff]
    %v397 = vld [vmem:[%s4 + $0x1a0] sm:$0xff]
    %v398 = vld [vmem:[%s4 + $0x1a8] sm:$0xff]
    %v399 = vld [vmem:[%s4 + $0x1b0] sm:$0xff]
    %v400 = vld [vmem:[%s4 + $0x1b8] sm:$0xff]
    %v401 = vld [vmem:[%s4 + $0x1c0] sm:$0xff]
    %v402 = vld [vmem:[%s4 + $0x1c8] sm:$0xff]
    %v403 = vld [vmem:[%s4 + $0x1d0] sm:$0xff]
    %v404 = vld [vmem:[%s4 + $0x1d8] sm:$0xff]
    %v405 = vld [vmem:[%s4 + $0x1e0] sm:$0xff]
    %v406 = vld [vmem:[%s4 + $0x1e8] sm:$0xff]
    %v407 = vld [vmem:[%s4 + $0x1f0] sm:$0xff]
    %v408 = vld [vmem:[%s4 + $0x1f8] sm:$0xff]
    %v409 = vld [vmem:[%s5] sm:$0x1]
    %v411 = vlaneseq
    %v412 = vshrl.u32 %v411, 7
    %v413 = vsub.s32 0, %v412
    %v414 = vrot.slane %v409, %v413
    %416 = vmatprep.subr.mxu0 0.0
    %417 = vmatpush1.msra.mxu0 %v345
    %418 = vmatprep.subr.mxu0 0.0
    %419 = vmatpush1.msra.mxu0 %v346
    %420 = vmatprep.subr.mxu0 0.0
    %421 = vmatpush1.msra.mxu0 %v347
    %422 = vmatprep.subr.mxu0 0.0
    %423 = vmatpush1.msra.mxu0 %v348
    %424 = vmatprep.subr.mxu0 0.0
    %425 = vmatpush1.msra.mxu0 %v349
    %426 = vmatprep.subr.mxu0 0.0
    %427 = vmatpush1.msra.mxu0 %v350
    %428 = vmatprep.subr.mxu0 0.0
    %429 = vmatpush1.msra.mxu0 %v351
    %430 = vmatprep.subr.mxu0 0.0
    %431 = vmatpush1.msra.mxu0 %v352
    %432 = vmatprep.subr.mxu0 0.0
    %433 = vmatpush1.msra.mxu0 %v353
    %434 = vmatprep.subr.mxu0 0.0
    %435 = vmatpush1.msra.mxu0 %v354
    %436 = vmatprep.subr.mxu0 0.0
    %437 = vmatpush1.msra.mxu0 %v355
    %438 = vmatprep.subr.mxu0 0.0
    %439 = vmatpush1.msra.mxu0 %v356
    %440 = vmatprep.subr.mxu0 0.0
    %441 = vmatpush1.msra.mxu0 %v357
    %442 = vmatprep.subr.mxu0 0.0
    %443 = vmatpush1.msra.mxu0 %v358
    %444 = vmatprep.subr.mxu0 0.0
    %445 = vmatpush1.msra.mxu0 %v359
    %446 = vmatprep.subr.mxu0 0.0
    %447 = vmatpush1.msra.mxu0 %v360
    %448 = vmatprep.subr.mxu0 0.0
    %449 = vmatpush1.msra.mxu0 %v361
    %450 = vmatprep.subr.mxu0 0.0
    %451 = vmatpush1.msra.mxu0 %v362
    %452 = vmatprep.subr.mxu0 0.0
    %453 = vmatpush1.msra.mxu0 %v363
    %454 = vmatprep.subr.mxu0 0.0
    %455 = vmatpush1.msra.mxu0 %v364
    %456 = vmatprep.subr.mxu0 0.0
    %457 = vmatpush1.msra.mxu0 %v365
    %458 = vmatprep.subr.mxu0 0.0
    %459 = vmatpush1.msra.mxu0 %v366
    %460 = vmatprep.subr.mxu0 0.0
    %461 = vmatpush1.msra.mxu0 %v367
    %462 = vmatprep.subr.mxu0 0.0
    %463 = vmatpush1.msra.mxu0 %v368
    %464 = vmatprep.subr.mxu0 0.0
    %465 = vmatpush1.msra.mxu0 %v369
    %466 = vmatprep.subr.mxu0 0.0
    %467 = vmatpush1.msra.mxu0 %v370
    %468 = vmatprep.subr.mxu0 0.0
    %469 = vmatpush1.msra.mxu0 %v371
    %470 = vmatprep.subr.mxu0 0.0
    %471 = vmatpush1.msra.mxu0 %v372
    %472 = vmatprep.subr.mxu0 0.0
    %473 = vmatpush1.msra.mxu0 %v373
    %474 = vmatprep.subr.mxu0 0.0
    %475 = vmatpush1.msra.mxu0 %v374
    %476 = vmatprep.subr.mxu0 0.0
    %477 = vmatpush1.msra.mxu0 %v375
    %478 = vmatprep.subr.mxu0 0.0
    %479 = vmatpush1.msra.mxu0 %v376
    %480 = vmatprep.mubr.f32.mxu0 %v342
    %481 = vmatmul.mubr.f32.gmra.mrb[0].mxu0 %v341
    %v482 = vpop.f32.mrb[0].mxu0
    %v483 = vadd.f32 %v414, %v482
    %v484 = vpop.f32.mrb[0].mxu0
    %485 = vdwg.mxu0
    %486 = vmatprep.subr.mxu0 0.0
    %487 = vmatpush1.msra.mxu0 %v377
    %488 = vmatprep.subr.mxu0 0.0
    %489 = vmatpush1.msra.mxu0 %v378
    %490 = vmatprep.subr.mxu0 0.0
    %491 = vmatpush1.msra.mxu0 %v379
    %492 = vmatprep.subr.mxu0 0.0
    %493 = vmatpush1.msra.mxu0 %v380
    %494 = vmatprep.subr.mxu0 0.0
    %495 = vmatpush1.msra.mxu0 %v381
    %496 = vmatprep.subr.mxu0 0.0
    %497 = vmatpush1.msra.mxu0 %v382
    %498 = vmatprep.subr.mxu0 0.0
    %499 = vmatpush1.msra.mxu0 %v383
    %500 = vmatprep.subr.mxu0 0.0
    %501 = vmatpush1.msra.mxu0 %v384
    %502 = vmatprep.subr.mxu0 0.0
    %503 = vmatpush1.msra.mxu0 %v385
    %504 = vmatprep.subr.mxu0 0.0
    %505 = vmatpush1.msra.mxu0 %v386
    %506 = vmatprep.subr.mxu0 0.0
    %507 = vmatpush1.msra.mxu0 %v387
    %508 = vmatprep.subr.mxu0 0.0
    %509 = vmatpush1.msra.mxu0 %v388
    %510 = vmatprep.subr.mxu0 0.0
    %511 = vmatpush1.msra.mxu0 %v389
    %512 = vmatprep.subr.mxu0 0.0
    %513 = vmatpush1.msra.mxu0 %v390
    %514 = vmatprep.subr.mxu0 0.0
    %515 = vmatpush1.msra.mxu0 %v391
    %516 = vmatprep.subr.mxu0 0.0
    %517 = vmatpush1.msra.mxu0 %v392
    %518 = vmatprep.subr.mxu0 0.0
    %519 = vmatpush1.msra.mxu0 %v393
    %520 = vmatprep.subr.mxu0 0.0
    %521 = vmatpush1.msra.mxu0 %v394
    %522 = vmatprep.subr.mxu0 0.0
    %523 = vmatpush1.msra.mxu0 %v395
    %524 = vmatprep.subr.mxu0 0.0
    %525 = vmatpush1.msra.mxu0 %v396
    %526 = vmatprep.subr.mxu0 0.0
    %527 = vmatpush1.msra.mxu0 %v397
    %528 = vmatprep.subr.mxu0 0.0
    %529 = vmatpush1.msra.mxu0 %v398
    %530 = vmatprep.subr.mxu0 0.0
    %531 = vmatpush1.msra.mxu0 %v399
    %532 = vmatprep.subr.mxu0 0.0
    %533 = vmatpush1.msra.mxu0 %v400
    %534 = vmatprep.subr.mxu0 0.0
    %535 = vmatpush1.msra.mxu0 %v401
    %536 = vmatprep.subr.mxu0 0.0
    %537 = vmatpush1.msra.mxu0 %v402
    %538 = vmatprep.subr.mxu0 0.0
    %539 = vmatpush1.msra.mxu0 %v403
    %540 = vmatprep.subr.mxu0 0.0
    %541 = vmatpush1.msra.mxu0 %v404
    %542 = vmatprep.subr.mxu0 0.0
    %543 = vmatpush1.msra.mxu0 %v405
    %544 = vmatprep.subr.mxu0 0.0
    %545 = vmatpush1.msra.mxu0 %v406
    %546 = vmatprep.subr.mxu0 0.0
    %547 = vmatpush1.msra.mxu0 %v407
    %548 = vmatprep.subr.mxu0 0.0
    %549 = vmatpush1.msra.mxu0 %v408
    %550 = vmatprep.mubr.f32.mxu0 %v344
    %551 = vmatmul.mubr.f32.gmra.mrb[0].mxu0 %v343
    %v552 = vpop.f32.mrb[0].mxu0
    %v553 = vadd.f32 %v483, %v552
    %v554 = vpop.f32.mrb[0].mxu0
    %555 = vdwg.mxu0
    %556 = vst.msk [vmem:[#allocation2] sm:$0xff] %vm53, %v553
    // Predicated region
    $region26: #{soda_mlp_forward.1} parent=1 // pred_check
      _
    $region27: #{soda_mlp_forward.1} parent=1 // pred_check_branch
      %558 = sbr.rel (0) target = $region29
    $region28: #{soda_mlp_forward.1} parent=1 // pred_region
      %s560 = ssub.s32 128, 128
      %561 = vsyncadd [#allocation3], %s560
      %s563 = sshll.u32 [#allocation2], 4
      %s564 = int_to_ptr.vmem [resolvable:$true] %s563
      %566 = dma.vmem_to_hbm [thread:$0]  %s564, 128, %s6, [#allocation3]
    $region29: #{soda_mlp_forward.1} parent=1 // pred_fallthru
      _
    // Predicated region
    $region30: #{soda_mlp_forward.1} parent=1 // pred_check
      _
    $region31: #{soda_mlp_forward.1} parent=1 // pred_check_branch
      %568 = sbr.rel (0) target = $region33
    $region32: #{soda_mlp_forward.1} parent=1 // pred_region
      %569 = dma.done [#allocation3], 128
    $region33: #{soda_mlp_forward.1} parent=1 // pred_fallthru
      _
    %570 = vsyncpa [#allocation3], 1

</llo_original>
